<compile_context>
chip_gen: v5e
topology: v5e:2x2
jax: 0.10.0
libtpu: 0.0.40
codegen_flags: <defaults>
</compile_context>

<pallas_src>
import functools

import jax
import jax.numpy as jnp
from jax.experimental import pallas as pl
from jax.experimental.pallas import tpu as pltpu

# Small, TPU-friendly shapes consistent with the module's forward:
VOCAB = 64        # len(dicts['w2ind'])
EMBED = 128       # args.embed_size (lane-dense: multiple of 128)
BATCH = 2
SEQ = 8           # B*S = 16 tokens

ROWS_PER_STEP = 8  # G: tokens gathered per grid step -> one (8, 128) out tile


def wordrep_gather_kernel(ids_ref, emb_hbm, out_ref, row_buf, sems, *,
                          rows_per_step):
    # ids_ref : SMEM (N_pad,) int32  — scalar-prefetched, pre-clamped token ids
    # emb_hbm : ANY/HBM (V, D)       — full table; only selected rows are DMA'd
    # out_ref : VMEM (G, D)          — this step's output tile (one dense store)
    # row_buf : VMEM (G, D) scratch  — DMA staging for the gathered rows
    # sems    : DMA semaphores (G,)
    base = pl.program_id(0) * rows_per_step

    # Issue all G row-gather DMAs up front so their latencies overlap,
    # then wait on all of them.
    copies = []
    for g in range(rows_per_step):            # static unroll
        tok = ids_ref[base + g]
        cp = pltpu.make_async_copy(
            emb_hbm.at[pl.ds(tok, 1), :],     # one (1, D) row at dynamic offset
            row_buf.at[pl.ds(g, 1), :],
            sems.at[g],
        )
        cp.start()
        copies.append(cp)
    for cp in copies:
        cp.wait()

    # Single lane-dense (G, D) store; cast here if the consumer wants bf16.
    out_ref[...] = row_buf[...].astype(out_ref.dtype)


def wordrep_forward(ids, embedding, *, rows_per_step=ROWS_PER_STEP,
                    out_dtype=None):
    """Pallas equivalent of WordRep.forward: out[b, s, :] = embedding[ids[b, s], :]."""
    B, S = ids.shape
    V, D = embedding.shape
    N = B * S
    G = rows_per_step
    n_steps = pl.cdiv(N, G)
    n_pad = n_steps * G
    out_dtype = embedding.dtype if out_dtype is None else out_dtype

    # Clamp so an out-of-range id can never address outside the table.
    ids_flat = jnp.clip(ids.reshape(-1).astype(jnp.int32), 0, V - 1)
    if n_pad != N:
        ids_flat = jnp.pad(ids_flat, (0, n_pad - N))  # pad tokens gather row 0

    kernel = functools.partial(wordrep_gather_kernel, rows_per_step=G)

    out_flat = pl.pallas_call(
        kernel,
        out_shape=jax.ShapeDtypeStruct((n_pad, D), out_dtype),
        grid_spec=pltpu.PrefetchScalarGridSpec(
            num_scalar_prefetch=1,                        # ids -> SMEM
            grid=(n_steps,),
            in_specs=[pl.BlockSpec(memory_space=pl.ANY)],  # table stays in HBM
            out_specs=pl.BlockSpec((G, D), lambda i, ids: (i, 0)),
            scratch_shapes=[
                pltpu.VMEM((G, D), embedding.dtype),       # row staging buffer
                pltpu.SemaphoreType.DMA((G,)),             # one sem per row DMA
            ],
        ),
        compiler_params=pltpu.CompilerParams(
            dimension_semantics=("parallel",),             # v7x: 2 TCs share grid
        ),
    )(ids_flat, embedding)

    return out_flat[:N].reshape(B, S, D)


if __name__ == "__main__":
    key = jax.random.PRNGKey(0)
    k_emb, k_ids = jax.random.split(key)

    # Deterministic parameter init mirroring the module's __init__ (no embed_file):
    #   init_width = 0.5 / embed_size; uniform_(-init_width, init_width)
    init_width = 0.5 / EMBED
    embedding = jax.random.uniform(
        k_emb, (VOCAB, EMBED), dtype=jnp.float32,
        minval=-init_width, maxval=init_width,
    )

    ids = jax.random.randint(k_ids, (BATCH, SEQ), 0, VOCAB, dtype=jnp.int32)

    out = wordrep_forward(ids, embedding)
    out = jax.block_until_ready(out)

    # Reference: plain-JAX embedding lookup (cat of single feature + eval dropout).
    ref = jnp.take(embedding, ids, axis=0)

    assert out.shape == (BATCH, SEQ, EMBED), out.shape
    assert out.dtype == jnp.float32, out.dtype
    assert jnp.array_equal(out, ref), "Pallas output mismatch vs reference"

    print("KERNEL_OK")
</pallas_src>

<mosaic_0001>
module attributes {stable_mosaic.version = 11 : i64} {
  func.func @wordrep_gather_kernel(%arg0: i32, %arg1: memref<16xi32, #tpu.memory_space<smem>>, %arg2: memref<64x128xf32, #tpu.memory_space<any>>, %arg3: memref<8x128xf32, #tpu.memory_space<vmem>>, %arg4: memref<8x128xf32, #tpu.memory_space<vmem>>, %arg5: memref<8x!tpu.dma_semaphore, #tpu.memory_space<semaphore_mem>>) attributes {dimension_semantics = [#tpu.dimension_semantics<parallel>], iteration_bounds = array<i64: 2>, scalar_prefetch = 1 : i64, scratch_operands = 2 : i64, tpu.core_type = #tpu.core_type<tc>, window_params = [{}, {transform_indices = @transform_1, window_bounds = array<i64: 8, 128>}]} {
    %c8_i32 = arith.constant 8 : i32
    %0 = arith.muli %arg0, %c8_i32 : i32
    %c0_i32 = arith.constant 0 : i32
    %1 = arith.addi %0, %c0_i32 : i32
    %2 = arith.index_cast %1 : i32 to index
    %3 = memref.load %arg1[%2] : memref<16xi32, #tpu.memory_space<smem>>
    %c0_i32_0 = arith.constant 0 : i32
    %c0_i32_1 = arith.constant 0 : i32
    %4 = tpu.memref_slice %arg2[%3, %c0_i32_1] : memref<64x128xf32, #tpu.memory_space<any>> -> memref<1x128xf32, #tpu.memory_space<any>>
    %c0_i32_2 = arith.constant 0 : i32
    %c0_i32_3 = arith.constant 0 : i32
    %5 = tpu.memref_slice %arg4[%c0_i32_2, %c0_i32_3] : memref<8x128xf32, #tpu.memory_space<vmem>> -> memref<1x128xf32, #tpu.memory_space<vmem>>
    %6 = tpu.memref_slice %arg5[%c0_i32_0] : memref<8x!tpu.dma_semaphore, #tpu.memory_space<semaphore_mem>> -> memref<1x!tpu.dma_semaphore, #tpu.memory_space<semaphore_mem>>
    %7 = tpu.memref_squeeze %6 : memref<1x!tpu.dma_semaphore, #tpu.memory_space<semaphore_mem>> -> memref<!tpu.dma_semaphore, #tpu.memory_space<semaphore_mem>>
    tpu.enqueue_dma source(%4 : memref<1x128xf32, #tpu.memory_space<any>>) target(%5 : memref<1x128xf32, #tpu.memory_space<vmem>>) target_semaphore(%7 : memref<!tpu.dma_semaphore, #tpu.memory_space<semaphore_mem>>)
    %c1_i32 = arith.constant 1 : i32
    %8 = arith.addi %0, %c1_i32 : i32
    %9 = arith.index_cast %8 : i32 to index
    %10 = memref.load %arg1[%9] : memref<16xi32, #tpu.memory_space<smem>>
    %c1_i32_4 = arith.constant 1 : i32
    %c0_i32_5 = arith.constant 0 : i32
    %11 = tpu.memref_slice %arg2[%10, %c0_i32_5] : memref<64x128xf32, #tpu.memory_space<any>> -> memref<1x128xf32, #tpu.memory_space<any>>
    %c1_i32_6 = arith.constant 1 : i32
    %c0_i32_7 = arith.constant 0 : i32
    %12 = tpu.memref_slice %arg4[%c1_i32_6, %c0_i32_7] : memref<8x128xf32, #tpu.memory_space<vmem>> -> memref<1x128xf32, #tpu.memory_space<vmem>>
    %13 = tpu.memref_slice %arg5[%c1_i32_4] : memref<8x!tpu.dma_semaphore, #tpu.memory_space<semaphore_mem>> -> memref<1x!tpu.dma_semaphore, #tpu.memory_space<semaphore_mem>>
    %14 = tpu.memref_squeeze %13 : memref<1x!tpu.dma_semaphore, #tpu.memory_space<semaphore_mem>> -> memref<!tpu.dma_semaphore, #tpu.memory_space<semaphore_mem>>
    tpu.enqueue_dma source(%11 : memref<1x128xf32, #tpu.memory_space<any>>) target(%12 : memref<1x128xf32, #tpu.memory_space<vmem>>) target_semaphore(%14 : memref<!tpu.dma_semaphore, #tpu.memory_space<semaphore_mem>>)
    %c2_i32 = arith.constant 2 : i32
    %15 = arith.addi %0, %c2_i32 : i32
    %16 = arith.index_cast %15 : i32 to index
    %17 = memref.load %arg1[%16] : memref<16xi32, #tpu.memory_space<smem>>
    %c2_i32_8 = arith.constant 2 : i32
    %c0_i32_9 = arith.constant 0 : i32
    %18 = tpu.memref_slice %arg2[%17, %c0_i32_9] : memref<64x128xf32, #tpu.memory_space<any>> -> memref<1x128xf32, #tpu.memory_space<any>>
    %c2_i32_10 = arith.constant 2 : i32
    %c0_i32_11 = arith.constant 0 : i32
    %19 = tpu.memref_slice %arg4[%c2_i32_10, %c0_i32_11] : memref<8x128xf32, #tpu.memory_space<vmem>> -> memref<1x128xf32, #tpu.memory_space<vmem>>
    %20 = tpu.memref_slice %arg5[%c2_i32_8] : memref<8x!tpu.dma_semaphore, #tpu.memory_space<semaphore_mem>> -> memref<1x!tpu.dma_semaphore, #tpu.memory_space<semaphore_mem>>
    %21 = tpu.memref_squeeze %20 : memref<1x!tpu.dma_semaphore, #tpu.memory_space<semaphore_mem>> -> memref<!tpu.dma_semaphore, #tpu.memory_space<semaphore_mem>>
    tpu.enqueue_dma source(%18 : memref<1x128xf32, #tpu.memory_space<any>>) target(%19 : memref<1x128xf32, #tpu.memory_space<vmem>>) target_semaphore(%21 : memref<!tpu.dma_semaphore, #tpu.memory_space<semaphore_mem>>)
    %c3_i32 = arith.constant 3 : i32
    %22 = arith.addi %0, %c3_i32 : i32
    %23 = arith.index_cast %22 : i32 to index
    %24 = memref.load %arg1[%23] : memref<16xi32, #tpu.memory_space<smem>>
    %c3_i32_12 = arith.constant 3 : i32
    %c0_i32_13 = arith.constant 0 : i32
    %25 = tpu.memref_slice %arg2[%24, %c0_i32_13] : memref<64x128xf32, #tpu.memory_space<any>> -> memref<1x128xf32, #tpu.memory_space<any>>
    %c3_i32_14 = arith.constant 3 : i32
    %c0_i32_15 = arith.constant 0 : i32
    %26 = tpu.memref_slice %arg4[%c3_i32_14, %c0_i32_15] : memref<8x128xf32, #tpu.memory_space<vmem>> -> memref<1x128xf32, #tpu.memory_space<vmem>>
    %27 = tpu.memref_slice %arg5[%c3_i32_12] : memref<8x!tpu.dma_semaphore, #tpu.memory_space<semaphore_mem>> -> memref<1x!tpu.dma_semaphore, #tpu.memory_space<semaphore_mem>>
    %28 = tpu.memref_squeeze %27 : memref<1x!tpu.dma_semaphore, #tpu.memory_space<semaphore_mem>> -> memref<!tpu.dma_semaphore, #tpu.memory_space<semaphore_mem>>
    tpu.enqueue_dma source(%25 : memref<1x128xf32, #tpu.memory_space<any>>) target(%26 : memref<1x128xf32, #tpu.memory_space<vmem>>) target_semaphore(%28 : memref<!tpu.dma_semaphore, #tpu.memory_space<semaphore_mem>>)
    %c4_i32 = arith.constant 4 : i32
    %29 = arith.addi %0, %c4_i32 : i32
    %30 = arith.index_cast %29 : i32 to index
    %31 = memref.load %arg1[%30] : memref<16xi32, #tpu.memory_space<smem>>
    %c4_i32_16 = arith.constant 4 : i32
    %c0_i32_17 = arith.constant 0 : i32
    %32 = tpu.memref_slice %arg2[%31, %c0_i32_17] : memref<64x128xf32, #tpu.memory_space<any>> -> memref<1x128xf32, #tpu.memory_space<any>>
    %c4_i32_18 = arith.constant 4 : i32
    %c0_i32_19 = arith.constant 0 : i32
    %33 = tpu.memref_slice %arg4[%c4_i32_18, %c0_i32_19] : memref<8x128xf32, #tpu.memory_space<vmem>> -> memref<1x128xf32, #tpu.memory_space<vmem>>
    %34 = tpu.memref_slice %arg5[%c4_i32_16] : memref<8x!tpu.dma_semaphore, #tpu.memory_space<semaphore_mem>> -> memref<1x!tpu.dma_semaphore, #tpu.memory_space<semaphore_mem>>
    %35 = tpu.memref_squeeze %34 : memref<1x!tpu.dma_semaphore, #tpu.memory_space<semaphore_mem>> -> memref<!tpu.dma_semaphore, #tpu.memory_space<semaphore_mem>>
    tpu.enqueue_dma source(%32 : memref<1x128xf32, #tpu.memory_space<any>>) target(%33 : memref<1x128xf32, #tpu.memory_space<vmem>>) target_semaphore(%35 : memref<!tpu.dma_semaphore, #tpu.memory_space<semaphore_mem>>)
    %c5_i32 = arith.constant 5 : i32
    %36 = arith.addi %0, %c5_i32 : i32
    %37 = arith.index_cast %36 : i32 to index
    %38 = memref.load %arg1[%37] : memref<16xi32, #tpu.memory_space<smem>>
    %c5_i32_20 = arith.constant 5 : i32
    %c0_i32_21 = arith.constant 0 : i32
    %39 = tpu.memref_slice %arg2[%38, %c0_i32_21] : memref<64x128xf32, #tpu.memory_space<any>> -> memref<1x128xf32, #tpu.memory_space<any>>
    %c5_i32_22 = arith.constant 5 : i32
    %c0_i32_23 = arith.constant 0 : i32
    %40 = tpu.memref_slice %arg4[%c5_i32_22, %c0_i32_23] : memref<8x128xf32, #tpu.memory_space<vmem>> -> memref<1x128xf32, #tpu.memory_space<vmem>>
    %41 = tpu.memref_slice %arg5[%c5_i32_20] : memref<8x!tpu.dma_semaphore, #tpu.memory_space<semaphore_mem>> -> memref<1x!tpu.dma_semaphore, #tpu.memory_space<semaphore_mem>>
    %42 = tpu.memref_squeeze %41 : memref<1x!tpu.dma_semaphore, #tpu.memory_space<semaphore_mem>> -> memref<!tpu.dma_semaphore, #tpu.memory_space<semaphore_mem>>
    tpu.enqueue_dma source(%39 : memref<1x128xf32, #tpu.memory_space<any>>) target(%40 : memref<1x128xf32, #tpu.memory_space<vmem>>) target_semaphore(%42 : memref<!tpu.dma_semaphore, #tpu.memory_space<semaphore_mem>>)
    %c6_i32 = arith.constant 6 : i32
    %43 = arith.addi %0, %c6_i32 : i32
    %44 = arith.index_cast %43 : i32 to index
    %45 = memref.load %arg1[%44] : memref<16xi32, #tpu.memory_space<smem>>
    %c6_i32_24 = arith.constant 6 : i32
    %c0_i32_25 = arith.constant 0 : i32
    %46 = tpu.memref_slice %arg2[%45, %c0_i32_25] : memref<64x128xf32, #tpu.memory_space<any>> -> memref<1x128xf32, #tpu.memory_space<any>>
    %c6_i32_26 = arith.constant 6 : i32
    %c0_i32_27 = arith.constant 0 : i32
    %47 = tpu.memref_slice %arg4[%c6_i32_26, %c0_i32_27] : memref<8x128xf32, #tpu.memory_space<vmem>> -> memref<1x128xf32, #tpu.memory_space<vmem>>
    %48 = tpu.memref_slice %arg5[%c6_i32_24] : memref<8x!tpu.dma_semaphore, #tpu.memory_space<semaphore_mem>> -> memref<1x!tpu.dma_semaphore, #tpu.memory_space<semaphore_mem>>
    %49 = tpu.memref_squeeze %48 : memref<1x!tpu.dma_semaphore, #tpu.memory_space<semaphore_mem>> -> memref<!tpu.dma_semaphore, #tpu.memory_space<semaphore_mem>>
    tpu.enqueue_dma source(%46 : memref<1x128xf32, #tpu.memory_space<any>>) target(%47 : memref<1x128xf32, #tpu.memory_space<vmem>>) target_semaphore(%49 : memref<!tpu.dma_semaphore, #tpu.memory_space<semaphore_mem>>)
    %c7_i32 = arith.constant 7 : i32
    %50 = arith.addi %0, %c7_i32 : i32
    %51 = arith.index_cast %50 : i32 to index
    %52 = memref.load %arg1[%51] : memref<16xi32, #tpu.memory_space<smem>>
    %c7_i32_28 = arith.constant 7 : i32
    %c0_i32_29 = arith.constant 0 : i32
    %53 = tpu.memref_slice %arg2[%52, %c0_i32_29] : memref<64x128xf32, #tpu.memory_space<any>> -> memref<1x128xf32, #tpu.memory_space<any>>
    %c7_i32_30 = arith.constant 7 : i32
    %c0_i32_31 = arith.constant 0 : i32
    %54 = tpu.memref_slice %arg4[%c7_i32_30, %c0_i32_31] : memref<8x128xf32, #tpu.memory_space<vmem>> -> memref<1x128xf32, #tpu.memory_space<vmem>>
    %55 = tpu.memref_slice %arg5[%c7_i32_28] : memref<8x!tpu.dma_semaphore, #tpu.memory_space<semaphore_mem>> -> memref<1x!tpu.dma_semaphore, #tpu.memory_space<semaphore_mem>>
    %56 = tpu.memref_squeeze %55 : memref<1x!tpu.dma_semaphore, #tpu.memory_space<semaphore_mem>> -> memref<!tpu.dma_semaphore, #tpu.memory_space<semaphore_mem>>
    tpu.enqueue_dma source(%53 : memref<1x128xf32, #tpu.memory_space<any>>) target(%54 : memref<1x128xf32, #tpu.memory_space<vmem>>) target_semaphore(%56 : memref<!tpu.dma_semaphore, #tpu.memory_space<semaphore_mem>>)
    %c0_i32_32 = arith.constant 0 : i32
    %c0_i32_33 = arith.constant 0 : i32
    %57 = tpu.memref_slice %arg2[%3, %c0_i32_33] : memref<64x128xf32, #tpu.memory_space<any>> -> memref<1x128xf32, #tpu.memory_space<any>>
    %c0_i32_34 = arith.constant 0 : i32
    %c0_i32_35 = arith.constant 0 : i32
    %58 = tpu.memref_slice %arg4[%c0_i32_34, %c0_i32_35] : memref<8x128xf32, #tpu.memory_space<vmem>> -> memref<1x128xf32, #tpu.memory_space<vmem>>
    %59 = tpu.memref_slice %arg5[%c0_i32_32] : memref<8x!tpu.dma_semaphore, #tpu.memory_space<semaphore_mem>> -> memref<1x!tpu.dma_semaphore, #tpu.memory_space<semaphore_mem>>
    %60 = tpu.memref_squeeze %59 : memref<1x!tpu.dma_semaphore, #tpu.memory_space<semaphore_mem>> -> memref<!tpu.dma_semaphore, #tpu.memory_space<semaphore_mem>>
    tpu.wait_dma2 semaphore(%60 : memref<!tpu.dma_semaphore, #tpu.memory_space<semaphore_mem>>) src(%57 : memref<1x128xf32, #tpu.memory_space<any>>) dst(%58 : memref<1x128xf32, #tpu.memory_space<vmem>>)
    %c1_i32_36 = arith.constant 1 : i32
    %c0_i32_37 = arith.constant 0 : i32
    %61 = tpu.memref_slice %arg2[%10, %c0_i32_37] : memref<64x128xf32, #tpu.memory_space<any>> -> memref<1x128xf32, #tpu.memory_space<any>>
    %c1_i32_38 = arith.constant 1 : i32
    %c0_i32_39 = arith.constant 0 : i32
    %62 = tpu.memref_slice %arg4[%c1_i32_38, %c0_i32_39] : memref<8x128xf32, #tpu.memory_space<vmem>> -> memref<1x128xf32, #tpu.memory_space<vmem>>
    %63 = tpu.memref_slice %arg5[%c1_i32_36] : memref<8x!tpu.dma_semaphore, #tpu.memory_space<semaphore_mem>> -> memref<1x!tpu.dma_semaphore, #tpu.memory_space<semaphore_mem>>
    %64 = tpu.memref_squeeze %63 : memref<1x!tpu.dma_semaphore, #tpu.memory_space<semaphore_mem>> -> memref<!tpu.dma_semaphore, #tpu.memory_space<semaphore_mem>>
    tpu.wait_dma2 semaphore(%64 : memref<!tpu.dma_semaphore, #tpu.memory_space<semaphore_mem>>) src(%61 : memref<1x128xf32, #tpu.memory_space<any>>) dst(%62 : memref<1x128xf32, #tpu.memory_space<vmem>>)
    %c2_i32_40 = arith.constant 2 : i32
    %c0_i32_41 = arith.constant 0 : i32
    %65 = tpu.memref_slice %arg2[%17, %c0_i32_41] : memref<64x128xf32, #tpu.memory_space<any>> -> memref<1x128xf32, #tpu.memory_space<any>>
    %c2_i32_42 = arith.constant 2 : i32
    %c0_i32_43 = arith.constant 0 : i32
    %66 = tpu.memref_slice %arg4[%c2_i32_42, %c0_i32_43] : memref<8x128xf32, #tpu.memory_space<vmem>> -> memref<1x128xf32, #tpu.memory_space<vmem>>
    %67 = tpu.memref_slice %arg5[%c2_i32_40] : memref<8x!tpu.dma_semaphore, #tpu.memory_space<semaphore_mem>> -> memref<1x!tpu.dma_semaphore, #tpu.memory_space<semaphore_mem>>
    %68 = tpu.memref_squeeze %67 : memref<1x!tpu.dma_semaphore, #tpu.memory_space<semaphore_mem>> -> memref<!tpu.dma_semaphore, #tpu.memory_space<semaphore_mem>>
    tpu.wait_dma2 semaphore(%68 : memref<!tpu.dma_semaphore, #tpu.memory_space<semaphore_mem>>) src(%65 : memref<1x128xf32, #tpu.memory_space<any>>) dst(%66 : memref<1x128xf32, #tpu.memory_space<vmem>>)
    %c3_i32_44 = arith.constant 3 : i32
    %c0_i32_45 = arith.constant 0 : i32
    %69 = tpu.memref_slice %arg2[%24, %c0_i32_45] : memref<64x128xf32, #tpu.memory_space<any>> -> memref<1x128xf32, #tpu.memory_space<any>>
    %c3_i32_46 = arith.constant 3 : i32
    %c0_i32_47 = arith.constant 0 : i32
    %70 = tpu.memref_slice %arg4[%c3_i32_46, %c0_i32_47] : memref<8x128xf32, #tpu.memory_space<vmem>> -> memref<1x128xf32, #tpu.memory_space<vmem>>
    %71 = tpu.memref_slice %arg5[%c3_i32_44] : memref<8x!tpu.dma_semaphore, #tpu.memory_space<semaphore_mem>> -> memref<1x!tpu.dma_semaphore, #tpu.memory_space<semaphore_mem>>
    %72 = tpu.memref_squeeze %71 : memref<1x!tpu.dma_semaphore, #tpu.memory_space<semaphore_mem>> -> memref<!tpu.dma_semaphore, #tpu.memory_space<semaphore_mem>>
    tpu.wait_dma2 semaphore(%72 : memref<!tpu.dma_semaphore, #tpu.memory_space<semaphore_mem>>) src(%69 : memref<1x128xf32, #tpu.memory_space<any>>) dst(%70 : memref<1x128xf32, #tpu.memory_space<vmem>>)
    %c4_i32_48 = arith.constant 4 : i32
    %c0_i32_49 = arith.constant 0 : i32
    %73 = tpu.memref_slice %arg2[%31, %c0_i32_49] : memref<64x128xf32, #tpu.memory_space<any>> -> memref<1x128xf32, #tpu.memory_space<any>>
    %c4_i32_50 = arith.constant 4 : i32
    %c0_i32_51 = arith.constant 0 : i32
    %74 = tpu.memref_slice %arg4[%c4_i32_50, %c0_i32_51] : memref<8x128xf32, #tpu.memory_space<vmem>> -> memref<1x128xf32, #tpu.memory_space<vmem>>
    %75 = tpu.memref_slice %arg5[%c4_i32_48] : memref<8x!tpu.dma_semaphore, #tpu.memory_space<semaphore_mem>> -> memref<1x!tpu.dma_semaphore, #tpu.memory_space<semaphore_mem>>
    %76 = tpu.memref_squeeze %75 : memref<1x!tpu.dma_semaphore, #tpu.memory_space<semaphore_mem>> -> memref<!tpu.dma_semaphore, #tpu.memory_space<semaphore_mem>>
    tpu.wait_dma2 semaphore(%76 : memref<!tpu.dma_semaphore, #tpu.memory_space<semaphore_mem>>) src(%73 : memref<1x128xf32, #tpu.memory_space<any>>) dst(%74 : memref<1x128xf32, #tpu.memory_space<vmem>>)
    %c5_i32_52 = arith.constant 5 : i32
    %c0_i32_53 = arith.constant 0 : i32
    %77 = tpu.memref_slice %arg2[%38, %c0_i32_53] : memref<64x128xf32, #tpu.memory_space<any>> -> memref<1x128xf32, #tpu.memory_space<any>>
    %c5_i32_54 = arith.constant 5 : i32
    %c0_i32_55 = arith.constant 0 : i32
    %78 = tpu.memref_slice %arg4[%c5_i32_54, %c0_i32_55] : memref<8x128xf32, #tpu.memory_space<vmem>> -> memref<1x128xf32, #tpu.memory_space<vmem>>
    %79 = tpu.memref_slice %arg5[%c5_i32_52] : memref<8x!tpu.dma_semaphore, #tpu.memory_space<semaphore_mem>> -> memref<1x!tpu.dma_semaphore, #tpu.memory_space<semaphore_mem>>
    %80 = tpu.memref_squeeze %79 : memref<1x!tpu.dma_semaphore, #tpu.memory_space<semaphore_mem>> -> memref<!tpu.dma_semaphore, #tpu.memory_space<semaphore_mem>>
    tpu.wait_dma2 semaphore(%80 : memref<!tpu.dma_semaphore, #tpu.memory_space<semaphore_mem>>) src(%77 : memref<1x128xf32, #tpu.memory_space<any>>) dst(%78 : memref<1x128xf32, #tpu.memory_space<vmem>>)
    %c6_i32_56 = arith.constant 6 : i32
    %c0_i32_57 = arith.constant 0 : i32
    %81 = tpu.memref_slice %arg2[%45, %c0_i32_57] : memref<64x128xf32, #tpu.memory_space<any>> -> memref<1x128xf32, #tpu.memory_space<any>>
    %c6_i32_58 = arith.constant 6 : i32
    %c0_i32_59 = arith.constant 0 : i32
    %82 = tpu.memref_slice %arg4[%c6_i32_58, %c0_i32_59] : memref<8x128xf32, #tpu.memory_space<vmem>> -> memref<1x128xf32, #tpu.memory_space<vmem>>
    %83 = tpu.memref_slice %arg5[%c6_i32_56] : memref<8x!tpu.dma_semaphore, #tpu.memory_space<semaphore_mem>> -> memref<1x!tpu.dma_semaphore, #tpu.memory_space<semaphore_mem>>
    %84 = tpu.memref_squeeze %83 : memref<1x!tpu.dma_semaphore, #tpu.memory_space<semaphore_mem>> -> memref<!tpu.dma_semaphore, #tpu.memory_space<semaphore_mem>>
    tpu.wait_dma2 semaphore(%84 : memref<!tpu.dma_semaphore, #tpu.memory_space<semaphore_mem>>) src(%81 : memref<1x128xf32, #tpu.memory_space<any>>) dst(%82 : memref<1x128xf32, #tpu.memory_space<vmem>>)
    %c7_i32_60 = arith.constant 7 : i32
    %c0_i32_61 = arith.constant 0 : i32
    %85 = tpu.memref_slice %arg2[%52, %c0_i32_61] : memref<64x128xf32, #tpu.memory_space<any>> -> memref<1x128xf32, #tpu.memory_space<any>>
    %c7_i32_62 = arith.constant 7 : i32
    %c0_i32_63 = arith.constant 0 : i32
    %86 = tpu.memref_slice %arg4[%c7_i32_62, %c0_i32_63] : memref<8x128xf32, #tpu.memory_space<vmem>> -> memref<1x128xf32, #tpu.memory_space<vmem>>
    %87 = tpu.memref_slice %arg5[%c7_i32_60] : memref<8x!tpu.dma_semaphore, #tpu.memory_space<semaphore_mem>> -> memref<1x!tpu.dma_semaphore, #tpu.memory_space<semaphore_mem>>
    %88 = tpu.memref_squeeze %87 : memref<1x!tpu.dma_semaphore, #tpu.memory_space<semaphore_mem>> -> memref<!tpu.dma_semaphore, #tpu.memory_space<semaphore_mem>>
    tpu.wait_dma2 semaphore(%88 : memref<!tpu.dma_semaphore, #tpu.memory_space<semaphore_mem>>) src(%85 : memref<1x128xf32, #tpu.memory_space<any>>) dst(%86 : memref<1x128xf32, #tpu.memory_space<vmem>>)
    %c0 = arith.constant 0 : index
    %c0_64 = arith.constant 0 : index
    %89 = vector.load %arg4[%c0, %c0_64] : memref<8x128xf32, #tpu.memory_space<vmem>>, vector<8x128xf32>
    %c0_65 = arith.constant 0 : index
    %c0_66 = arith.constant 0 : index
    %90 = vector.load %arg3[%c0_65, %c0_66] : memref<8x128xf32, #tpu.memory_space<vmem>>, vector<8x128xf32>
    tpu.vector_store %arg3[%c0_65, %c0_66], %89 {strides = array<i32>} : memref<8x128xf32, #tpu.memory_space<vmem>>, vector<8x128xf32>,
    return
  }
  func.func @transform_1(%arg0: i32, %arg1: memref<16xi32, #tpu.memory_space<smem>>) -> (i32, i32) {
    %c0_i32 = arith.constant 0 : i32
    %c0_i32_0 = arith.constant 0 : i32
    return %arg0, %c0_i32 : i32, i32
  }
}

</mosaic_0001>

<llo_original>
// kernel: tpu_custom_call.1
$region0: #{tpu_custom_call.1}
  #allocation0 [shape = 'u32[]', space=smem, size = 0x4, offset = 0x4, fixed_abs, tag = 'smem constant byte address 0x4 - core index']
  #allocation1 [shape = 'u32[72,128]{1,0:T(1,128)}', space=vmem, size = 0x9000, scoped, tag = 'internal scratch']
  #allocation2 [shape = 'f32[8,128]{1,0:T(8,128)}', space=vmem, size = 0x1000, scoped, tag = 'scratch operand']
  #allocation3 [shape = 's32[8]{0}', space=sflag, size = 0x20, scoped, tag = 'scratch operand']
  #allocation4 [shape = 's32[1]{0}', space=sflag, size = 0x4, scoped, tag = 'scoped memory for tpu_custom_call.1']
  #allocation5 [shape = 'u8[512]{0}', space=smem, size = 0x200, scoped, tag = 'prefetched SMEM operand 0']
  #allocation8 [shape = 's32[]', space=sflag, size = 0x4, offset = 0, fixed_abs, tag = 'sflag constant byte address 0x0 - dummy sync flag']
  #allocation9 [shape = 's32[]', space=sflag, size = 0x4, offset = 0, fixed_abs, tag = 'sflag constant byte address 0x0 - dummy sync flag']
  #allocation10 [shape = 'u32[]', space=smem, size = 0x4, offset = 0x44, fixed_abs, tag = 'smem constant byte address 0x44 - assertion arg 0']
  #allocation11 [shape = 'u32[]', space=smem, size = 0x4, offset = 0x48, fixed_abs, tag = 'smem constant byte address 0x48 - assertion arg 1']
  #allocation12 [shape = 's32[]', space=sflag, size = 0x4, offset = 0, fixed_abs, tag = 'sflag constant byte address 0x0 - dummy sync flag']
  #allocation13 [shape = 's32[]', space=sflag, size = 0x4, offset = 0, fixed_abs, tag = 'sflag constant byte address 0x0 - dummy sync flag']
  #allocation14 [shape = 's32[]', space=sflag, size = 0x4, offset = 0, fixed_abs, tag = 'sflag constant byte address 0x0 - dummy sync flag']
  #allocation15 [shape = 's32[]', space=sflag, size = 0x4, offset = 0, fixed_abs, tag = 'sflag constant byte address 0x0 - dummy sync flag']
  #allocation16 [shape = 's32[]', space=sflag, size = 0x4, offset = 0, fixed_abs, tag = 'sflag constant byte address 0x0 - dummy sync flag']
  #allocation17 [shape = 's32[]', space=sflag, size = 0x4, offset = 0, fixed_abs, tag = 'sflag constant byte address 0x0 - dummy sync flag']
  #allocation18 [shape = 's32[]', space=sflag, size = 0x4, offset = 0, fixed_abs, tag = 'sflag constant byte address 0x0 - dummy sync flag']
  #allocation19 [shape = 's32[]', space=sflag, size = 0x4, offset = 0, fixed_abs, tag = 'sflag constant byte address 0x0 - dummy sync flag']
  #allocation20 [shape = 's32[]', space=sflag, size = 0x4, offset = 0, fixed_abs, tag = 'sflag constant byte address 0x0 - dummy sync flag']
  #allocation21 [shape = 's32[]', space=sflag, size = 0x4, offset = 0, fixed_abs, tag = 'sflag constant byte address 0x0 - dummy sync flag']
  #allocation22 [shape = 's32[]', space=sflag, size = 0x4, offset = 0, fixed_abs, tag = 'sflag constant byte address 0x0 - dummy sync flag']
  #allocation23 [shape = 's32[]', space=sflag, size = 0x4, offset = 0, fixed_abs, tag = 'sflag constant byte address 0x0 - dummy sync flag']
  #allocation24 [shape = 's32[]', space=sflag, size = 0x4, offset = 0, fixed_abs, tag = 'sflag constant byte address 0x0 - dummy sync flag']
  #allocation25 [shape = 's32[]', space=sflag, size = 0x4, offset = 0, fixed_abs, tag = 'sflag constant byte address 0x0 - dummy sync flag']
  %s0 = inlined_call_operand.hbm [shape: s32[16], index: 0, kind: input, shape index: {}]
  %s1 = inlined_call_operand.hbm [shape: f32[64,128], index: 1, kind: input, shape index: {}]
  %s2 = inlined_call_operand.hbm [shape: f32[16,128], index: 2, kind: output, shape index: {}]
  %s3 = sld [smem:[#allocation0]]
  $region57: #{tpu_custom_call.1} parent=0
    _
  %s5 = ssub.s32 1, %s3
  %s6 = scalar_select 0, %s5, %s3
  %s8 = sshll.u32 %s0, 4
  %s9 = int_to_ptr.hbm [resolvable:$true] %s8
  %11 = dma.hbm_to_smem %s9, 16, [#allocation5], [#allocation4]
  %13 = dma.done [#allocation4], 16
  %14 = sfence
  $region1: #{tpu_custom_call.1} parent=0
    #allocation6 [shape = 'u8[8192]{0}', space=vmem, size = 0x2000, scoped, tag = 'output window, operand 0']
    #allocation7 [shape = 's32[2]{0}', space=sflag, size = 0x8, scoped, tag = 'scoped memory for tpu_custom_call.1']
    %15 = vsyncpa [#allocation7], 0
    %s16 = scalar_lea.sflag [#allocation7], 1
    %17 = vsyncpa %s16, 0
    loop: start=0, step=1, limit=3
    $region2: #{tpu_custom_call.1} parent=1 // loop_pre_header
      _
    $region3: #{tpu_custom_call.1} parent=1 // loop_header
      %s19 = sphi 0, %s23
      %p20 = scmp.ge.s32.totalorder %s19, 3
      %s28 = sphi 0, %s30
      %s31 = sphi 0, %s28
      %s41 = sphi 0, %s31
    $region4: #{tpu_custom_call.1} parent=1 // loop_header_branch
      %22 = sbr.rel (%p20) target = $region8
    $region5: #{tpu_custom_call.1} parent=1 // loop_body
      %s24 = ssub.s32 %s19, 1
      %s25 = sadd.s32 %s19, 1
      %s26 = ssub.s32 %s19, %s25
      %p27 = scmp.eq.s32.totalorder %s26, 0
      %s29 = sadd.s32 %s28, 1
      %s30 = scalar_select %p27, %s28, %s29
      %p32 = pneg %p27
      %p33 = scmp.eq.s32.totalorder %s19, 1
      %p34 = por %p32, %p33
      %p35 = scmp.ne.s32.totalorder %s28, %s31
      %p36 = scmp.eq.s32.totalorder %s19, 0
      %p37 = por %p35, %p36
      %p38 = scmp.ne.s32.totalorder %s28, %s31
      %p39 = scmp.eq.s32.totalorder %s24, 1
      %p40 = por %p38, %p39
      %p42 = scmp.ne.s32.totalorder %s31, %s41
      %p43 = scmp.eq.s32.totalorder %s24, 0
      %p44 = por %p42, %p43
      %p45 = scmp.lt.s32.totalorder %s19, 2
      // Predicated region
      $region9: #{tpu_custom_call.1} parent=5 // pred_check
        %p46 = pneg %p45
      $region10: #{tpu_custom_call.1} parent=5 // pred_check_branch
        %48 = sbr.rel (%p46) target = $region12
      $region11: #{tpu_custom_call.1} parent=5 // pred_region
        %p49 = pneg %p37
        %p50 = pneg %p34
        %s51 = sand.u32 %s28, 1
        %s52 = scalar_lea.sflag [#allocation7], %s51
        %s53 = sand.u32 %s28, 1
        %s54 = smul.addr %s53, 8
        %s55 = scalar_lea.vmem [#allocation6], %s54
        %s56 = smul.u32 %s19, 8
        %s57 = sld [smem:[#allocation5 + %s56]]
        %s58 = scalar_lea.hbm %s1, %s57
        // Predicated region
        $region13: #{tpu_custom_call.1} parent=11 // pred_check
          _
        $region14: #{tpu_custom_call.1} parent=11 // pred_check_branch
          %60 = sbr.rel target = $region16
        $region15: #{tpu_custom_call.1} parent=11 // pred_region
          %61 = sst [smem:[#allocation10]] [#allocation9]
          %62 = sst [smem:[#allocation11]] [#allocation8]
        $region16: #{tpu_custom_call.1} parent=11 // pred_fallthru
          _
        %64 = shalt.err (0)
        %s66 = sshll.u32 %s58, 4
        %s67 = int_to_ptr.hbm [resolvable:$true] %s66
        %s68 = sshll.u32 [#allocation2], 4
        %s69 = int_to_ptr.vmem [resolvable:$true] %s68
        %71 = dma.hbm_to_vmem [thread:$0]  %s67, 16, %s69, [#allocation3]
        %s72 = sadd.s32 %s56, 1
        %s73 = sld [smem:[#allocation5 + %s72]]
        %s74 = scalar_lea.hbm %s1, %s73
        %s75 = scalar_lea.vmem [#allocation2], 1
        %s76 = scalar_lea.sflag [#allocation3], 1
        // Predicated region
        $region17: #{tpu_custom_call.1} parent=11 // pred_check
          _
        $region18: #{tpu_custom_call.1} parent=11 // pred_check_branch
          %78 = sbr.rel target = $region20
        $region19: #{tpu_custom_call.1} parent=11 // pred_region
          %79 = sst [smem:[#allocation10]] [#allocation13]
          %80 = sst [smem:[#allocation11]] [#allocation12]
        $region20: #{tpu_custom_call.1} parent=11 // pred_fallthru
          _
        %82 = shalt.err (0)
        %s84 = sshll.u32 %s74, 4
        %s85 = int_to_ptr.hbm [resolvable:$true] %s84
        %s86 = sshll.u32 %s75, 4
        %s87 = int_to_ptr.vmem [resolvable:$true] %s86
        %89 = dma.hbm_to_vmem [thread:$0]  %s85, 16, %s87, %s76
        %s90 = sadd.s32 %s56, 2
        %s91 = sld [smem:[#allocation5 + %s90]]
        %s92 = scalar_lea.hbm %s1, %s91
        %s93 = scalar_lea.vmem [#allocation2], 2
        %s94 = scalar_lea.sflag [#allocation3], 2
        // Predicated region
        $region21: #{tpu_custom_call.1} parent=11 // pred_check
          _
        $region22: #{tpu_custom_call.1} parent=11 // pred_check_branch
          %96 = sbr.rel target = $region24
        $region23: #{tpu_custom_call.1} parent=11 // pred_region
          %97 = sst [smem:[#allocation10]] [#allocation15]
          %98 = sst [smem:[#allocation11]] [#allocation14]
        $region24: #{tpu_custom_call.1} parent=11 // pred_fallthru
          _
        %100 = shalt.err (0)
        %s102 = sshll.u32 %s92, 4
        %s103 = int_to_ptr.hbm [resolvable:$true] %s102
        %s104 = sshll.u32 %s93, 4
        %s105 = int_to_ptr.vmem [resolvable:$true] %s104
        %107 = dma.hbm_to_vmem [thread:$0]  %s103, 16, %s105, %s94
        %s108 = sadd.s32 %s56, 3
        %s109 = sld [smem:[#allocation5 + %s108]]
        %s110 = scalar_lea.hbm %s1, %s109
        %s111 = scalar_lea.vmem [#allocation2], 3
        %s112 = scalar_lea.sflag [#allocation3], 3
        // Predicated region
        $region25: #{tpu_custom_call.1} parent=11 // pred_check
          _
        $region26: #{tpu_custom_call.1} parent=11 // pred_check_branch
          %114 = sbr.rel target = $region28
        $region27: #{tpu_custom_call.1} parent=11 // pred_region
          %115 = sst [smem:[#allocation10]] [#allocation17]
          %116 = sst [smem:[#allocation11]] [#allocation16]
        $region28: #{tpu_custom_call.1} parent=11 // pred_fallthru
          _
        %118 = shalt.err (0)
        %s120 = sshll.u32 %s110, 4
        %s121 = int_to_ptr.hbm [resolvable:$true] %s120
        %s122 = sshll.u32 %s111, 4
        %s123 = int_to_ptr.vmem [resolvable:$true] %s122
        %125 = dma.hbm_to_vmem [thread:$0]  %s121, 16, %s123, %s112
        %s126 = sadd.s32 %s56, 4
        %s127 = sld [smem:[#allocation5 + %s126]]
        %s128 = scalar_lea.hbm %s1, %s127
        %s129 = scalar_lea.vmem [#allocation2], 4
        %s130 = scalar_lea.sflag [#allocation3], 4
        // Predicated region
        $region29: #{tpu_custom_call.1} parent=11 // pred_check
          _
        $region30: #{tpu_custom_call.1} parent=11 // pred_check_branch
          %132 = sbr.rel target = $region32
        $region31: #{tpu_custom_call.1} parent=11 // pred_region
          %133 = sst [smem:[#allocation10]] [#allocation19]
          %134 = sst [smem:[#allocation11]] [#allocation18]
        $region32: #{tpu_custom_call.1} parent=11 // pred_fallthru
          _
        %136 = shalt.err (0)
        %s138 = sshll.u32 %s128, 4
        %s139 = int_to_ptr.hbm [resolvable:$true] %s138
        %s140 = sshll.u32 %s129, 4
        %s141 = int_to_ptr.vmem [resolvable:$true] %s140
        %143 = dma.hbm_to_vmem [thread:$0]  %s139, 16, %s141, %s130
        %s144 = sadd.s32 %s56, 5
        %s145 = sld [smem:[#allocation5 + %s144]]
        %s146 = scalar_lea.hbm %s1, %s145
        %s147 = scalar_lea.vmem [#allocation2], 5
        %s148 = scalar_lea.sflag [#allocation3], 5
        // Predicated region
        $region33: #{tpu_custom_call.1} parent=11 // pred_check
          _
        $region34: #{tpu_custom_call.1} parent=11 // pred_check_branch
          %150 = sbr.rel target = $region36
        $region35: #{tpu_custom_call.1} parent=11 // pred_region
          %151 = sst [smem:[#allocation10]] [#allocation21]
          %152 = sst [smem:[#allocation11]] [#allocation20]
        $region36: #{tpu_custom_call.1} parent=11 // pred_fallthru
          _
        %154 = shalt.err (0)
        %s156 = sshll.u32 %s146, 4
        %s157 = int_to_ptr.hbm [resolvable:$true] %s156
        %s158 = sshll.u32 %s147, 4
        %s159 = int_to_ptr.vmem [resolvable:$true] %s158
        %161 = dma.hbm_to_vmem [thread:$0]  %s157, 16, %s159, %s148
        %s162 = sadd.s32 %s56, 6
        %s163 = sld [smem:[#allocation5 + %s162]]
        %s164 = scalar_lea.hbm %s1, %s163
        %s165 = scalar_lea.vmem [#allocation2], 6
        %s166 = scalar_lea.sflag [#allocation3], 6
        // Predicated region
        $region37: #{tpu_custom_call.1} parent=11 // pred_check
          _
        $region38: #{tpu_custom_call.1} parent=11 // pred_check_branch
          %168 = sbr.rel target = $region40
        $region39: #{tpu_custom_call.1} parent=11 // pred_region
          %169 = sst [smem:[#allocation10]] [#allocation23]
          %170 = sst [smem:[#allocation11]] [#allocation22]
        $region40: #{tpu_custom_call.1} parent=11 // pred_fallthru
          _
        %172 = shalt.err (0)
        %s174 = sshll.u32 %s164, 4
        %s175 = int_to_ptr.hbm [resolvable:$true] %s174
        %s176 = sshll.u32 %s165, 4
        %s177 = int_to_ptr.vmem [resolvable:$true] %s176
        %179 = dma.hbm_to_vmem [thread:$0]  %s175, 16, %s177, %s166
        %s180 = sadd.s32 %s56, 7
        %s181 = sld [smem:[#allocation5 + %s180]]
        %s182 = scalar_lea.hbm %s1, %s181
        %s183 = scalar_lea.vmem [#allocation2], 7
        %s184 = scalar_lea.sflag [#allocation3], 7
        // Predicated region
        $region41: #{tpu_custom_call.1} parent=11 // pred_check
          _
        $region42: #{tpu_custom_call.1} parent=11 // pred_check_branch
          %186 = sbr.rel target = $region44
        $region43: #{tpu_custom_call.1} parent=11 // pred_region
          %187 = sst [smem:[#allocation10]] [#allocation25]
          %188 = sst [smem:[#allocation11]] [#allocation24]
        $region44: #{tpu_custom_call.1} parent=11 // pred_fallthru
          _
        %190 = shalt.err (0)
        %s192 = sshll.u32 %s182, 4
        %s193 = int_to_ptr.hbm [resolvable:$true] %s192
        %s194 = sshll.u32 %s183, 4
        %s195 = int_to_ptr.vmem [resolvable:$true] %s194
        %197 = dma.hbm_to_vmem [thread:$0]  %s193, 16, %s195, %s184
        %s198 = smul.u32 1, 1
        %s199 = sshll.u32 %s198, 4
        %200 = dma.done [#allocation3], %s199
        %s201 = sshll.u32 %s198, 4
        %202 = dma.done %s76, %s201
        %s203 = sshll.u32 %s198, 4
        %204 = dma.done %s94, %s203
        %s205 = sshll.u32 %s198, 4
        %206 = dma.done %s112, %s205
        %s207 = sshll.u32 %s198, 4
        %208 = dma.done %s130, %s207
        %s209 = sshll.u32 %s198, 4
        %210 = dma.done %s148, %s209
        %s211 = sshll.u32 %s198, 4
        %212 = dma.done %s166, %s211
        %s213 = sshll.u32 %s198, 4
        %214 = dma.done %s184, %s213
        %v215 = vld [vmem:[#allocation2] sm:$0xff]
        %216 = vst [vmem:[%s55] sm:$0xff] %v215
        %s217 = sand.u32 %s28, 1
        %s218 = scalar_lea.sflag [#allocation7], %s217
        %s219 = sand.u32 %s28, 1
        %s220 = smul.addr %s219, 8
        %s221 = scalar_lea.vmem [#allocation6], %s220
        // Predicated region
        $region45: #{tpu_custom_call.1} parent=11 // pred_check
          %p222 = pneg %p34
        $region46: #{tpu_custom_call.1} parent=11 // pred_check_branch
          %224 = sbr.rel (%p222) target = $region48
        $region47: #{tpu_custom_call.1} parent=11 // pred_region
          %226 = vsyncadd %s218, 0
          %s227 = smul.addr %s19, 8
          %s228 = scalar_lea.hbm %s2, %s227
          %s230 = sshll.u32 %s221, 4
          %s231 = int_to_ptr.vmem [resolvable:$true] %s230
          %s232 = sshll.u32 %s228, 4
          %s233 = int_to_ptr.hbm [resolvable:$true] %s232
          %235 = dma.vmem_to_hbm [thread:$0]  %s231, 128, %s233, %s218
        $region48: #{tpu_custom_call.1} parent=11 // pred_fallthru
          _
      $region12: #{tpu_custom_call.1} parent=5 // pred_fallthru
        _
      %p236 = scmp.le.s32.totalorder 1, %s19
      // Predicated region
      $region49: #{tpu_custom_call.1} parent=5 // pred_check
        %p237 = pneg %p236
      $region50: #{tpu_custom_call.1} parent=5 // pred_check_branch
        %239 = sbr.rel (%p237) target = $region52
      $region51: #{tpu_custom_call.1} parent=5 // pred_region
        %s240 = ssub.s32 %s19, 1
        // Predicated region
        $region53: #{tpu_custom_call.1} parent=51 // pred_check
          %p241 = pneg %p40
        $region54: #{tpu_custom_call.1} parent=51 // pred_check_branch
          %243 = sbr.rel (%p241) target = $region56
        $region55: #{tpu_custom_call.1} parent=51 // pred_region
          %s244 = sand.u32 %s31, 1
          %s245 = scalar_lea.sflag [#allocation7], %s244
          %s246 = sand.u32 %s31, 1
          %s247 = smul.addr %s246, 8
          %s248 = scalar_lea.vmem [#allocation6], %s247
          %250 = dma.done %s245, 128
        $region56: #{tpu_custom_call.1} parent=51 // pred_fallthru
          _
      $region52: #{tpu_custom_call.1} parent=5 // pred_fallthru
        _
    $region6: #{tpu_custom_call.1} parent=1 // loop_footer
      %s23 = sadd.s32 1, %s19
    $region7: #{tpu_custom_call.1} parent=1 // loop_footer_branch
      %18 = sbr.rel target = $region3
    $region8: #{tpu_custom_call.1} parent=1 // loop_exit
      _
    %251 = vsyncpa [#allocation7], 1
    %s252 = scalar_lea.sflag [#allocation7], 1
    %253 = vsyncpa %s252, 1
  %254 = vsyncmov [#allocation3]
  %s255 = vpop.sfrf %254
  %p256 = scmp.eq.s32.totalorder %s255, 0
  %p257 = pneg %p256
  %259 = shalt.err (%p257)
  %s260 = scalar_lea.sflag [#allocation3], 1
  %261 = vsyncmov %s260
  %s262 = vpop.sfrf %261
  %p263 = scmp.eq.s32.totalorder %s262, 0
  %p264 = pneg %p263
  %266 = shalt.err (%p264)
  %s267 = scalar_lea.sflag [#allocation3], 2
  %268 = vsyncmov %s267
  %s269 = vpop.sfrf %268
  %p270 = scmp.eq.s32.totalorder %s269, 0
  %p271 = pneg %p270
  %273 = shalt.err (%p271)
  %s274 = scalar_lea.sflag [#allocation3], 3
  %275 = vsyncmov %s274
  %s276 = vpop.sfrf %275
  %p277 = scmp.eq.s32.totalorder %s276, 0
  %p278 = pneg %p277
  %280 = shalt.err (%p278)
  %s281 = scalar_lea.sflag [#allocation3], 4
  %282 = vsyncmov %s281
  %s283 = vpop.sfrf %282
  %p284 = scmp.eq.s32.totalorder %s283, 0
  %p285 = pneg %p284
  %287 = shalt.err (%p285)
  %s288 = scalar_lea.sflag [#allocation3], 5
  %289 = vsyncmov %s288
  %s290 = vpop.sfrf %289
  %p291 = scmp.eq.s32.totalorder %s290, 0
  %p292 = pneg %p291
  %294 = shalt.err (%p292)
  %s295 = scalar_lea.sflag [#allocation3], 6
  %296 = vsyncmov %s295
  %s297 = vpop.sfrf %296
  %p298 = scmp.eq.s32.totalorder %s297, 0
  %p299 = pneg %p298
  %301 = shalt.err (%p299)
  %s302 = scalar_lea.sflag [#allocation3], 7
  %303 = vsyncmov %s302
  %s304 = vpop.sfrf %303
  %p305 = scmp.eq.s32.totalorder %s304, 0
  %p306 = pneg %p305
  %308 = shalt.err (%p306)

</llo_original>
